<compile_context>
chip_gen: v5e
topology: v5e:2x2
jax: 0.10.0
libtpu: 0.0.40
codegen_flags: <defaults>
</compile_context>

<pallas_src>
import numpy as np
import jax
import jax.numpy as jnp
from jax import lax
from jax.experimental import pallas as pl
from jax.experimental.pallas import tpu as pltpu


DIRECTION_NAMES = [
    "left_to_right",
    "right_to_left",
    "top_to_bottom",
    "bottom_to_top",
    "top_left_to_bottom_right",
    "bottom_right_to_top_left",
    "top_right_to_bottom_left",
    "bottom_left_to_top_right",
]

_CHUNK = 8  # destination tokens assembled per inner-loop iteration (1 sublane tile)


# --------------------------------------------------------------------------
# Pure-numpy mirror of the torch forward (reshape semantics for tb / bt).
# Used only for the correctness check in __main__.
# --------------------------------------------------------------------------
def _directions_2d(a, H, W):
    """a: (HW, C).  Returns the 8 re-ordered (HW, C) arrays (reference)."""
    HW, C = a.shape
    pe = a.T  # (C, HW) == patch_embeds[b]

    ind5 = []
    for s in range(H + W - 1):
        for y in range(max(0, s - W + 1), min(H, s + 1)):
            xx = s - y
            ind5.append(y * W + xx)

    ind6 = []
    for s in range(H + W - 1):
        for xx in range(min(W - 1, s), max(-1, s - H), -1):
            y = s - xx
            if y < H and xx < W:
                ind6.append(y * W + xx)
    ind6.reverse()

    ind7 = []
    for s in range(W + H - 1):
        for y in range(max(0, s - W + 1), min(H, s + 1)):
            xx = s - y
            ind7.append(y * W + (W - 1 - xx))
    ind8 = list(ind7)  # indices8 is built identically to indices7

    lr = pe.T                                        # left_to_right
    rl = pe[:, ::-1].T                               # right_to_left
    tb = pe.reshape(C * H, W).T.reshape(HW, C)       # top_to_bottom (.view -> reshape)
    bt = tb[::-1, :]                                 # bottom_to_top
    d5 = pe[:, ind5].T                               # top_left_to_bottom_right
    d6 = pe[:, ind6].T                               # bottom_right_to_top_left
    d7 = pe[:, ind7].T                               # top_right_to_bottom_left
    d8 = pe[:, ind8][:, ::-1].T                      # bottom_left_to_top_right
    return [lr, rl, tb, bt, d5, d6, d7, d8]


# --------------------------------------------------------------------------
# Index-table construction (host, once per (H, W), cached device-resident).
# The kernel gathers 6 token orders; left_to_right is returned directly from
# the wrapper and bottom_to_top is a flip of top_to_bottom in the wrapper.
#
#   row 0: right_to_left            (reversed tokens)
#   row 1: column scan              (tb/bt pre-gather: tok[w*H+h] = h*W+w)
#   row 2: top_left_to_bottom_right (ind5)
#   row 3: bottom_right_to_top_left (ind6)
#   row 4: top_right_to_bottom_left (ind7)
#   row 5: bottom_left_to_top_right (reversed ind8)
# --------------------------------------------------------------------------
def _build_token_tables(H, W):
    HW = H * W

    ind5 = []
    for s in range(H + W - 1):
        for y in range(max(0, s - W + 1), min(H, s + 1)):
            xx = s - y
            ind5.append(y * W + xx)

    ind6 = []
    for s in range(H + W - 1):
        for xx in range(min(W - 1, s), max(-1, s - H), -1):
            y = s - xx
            if y < H and xx < W:
                ind6.append(y * W + xx)
    ind6.reverse()

    ind7 = []
    for s in range(W + H - 1):
        for y in range(max(0, s - W + 1), min(H, s + 1)):
            xx = s - y
            ind7.append(y * W + (W - 1 - xx))
    ind8 = list(ind7)  # indices8 built identically in the reference

    rl = np.arange(HW - 1, -1, -1, dtype=np.int64)
    colscan = np.arange(HW, dtype=np.int64).reshape(H, W).T.reshape(-1)
    d8 = np.asarray(ind8, dtype=np.int64)[::-1]

    tbl = np.stack(
        [rl, colscan,
         np.asarray(ind5, dtype=np.int64),
         np.asarray(ind6, dtype=np.int64),
         np.asarray(ind7, dtype=np.int64),
         d8],
        axis=0,
    ).astype(np.int32)
    return tbl  # (6, HW) int32


# ----------------------------- Pallas kernel -------------------------------

def _gather_kernel(tok_ref, x_ref, o_ref):
    # tok_ref: (n_dirs, HW) int32 in SMEM (scalar-prefetched source-token table)
    # x_ref  : (HW, Ct)  C-tile of x for the current batch element (VMEM)
    # o_ref  : (HW, Ct)  output block for (direction d, batch b, C-tile ct)
    d = pl.program_id(2)
    num_tokens, c_blk = o_ref.shape
    n_chunks = num_tokens // _CHUNK
    rem = num_tokens - n_chunks * _CHUNK

    # Loop-invariant sublane-id pattern for placing rows into the chunk.
    row_id = lax.broadcasted_iota(jnp.int32, (_CHUNK, c_blk), 0)

    def chunk_body(kc, carry):
        t0 = pl.multiple_of(kc * _CHUNK, _CHUNK)
        # 8 independent full-width row loads (ILP for the LLO scheduler).
        rows = [x_ref[pl.ds(tok_ref[d, t0 + j], 1), :] for j in range(_CHUNK)]
        # Assemble an (8, Ct) value: row j -> sublane j (broadcast + select).
        chunk = jnp.broadcast_to(rows[0], (_CHUNK, c_blk))
        for j in range(1, _CHUNK):
            chunk = jnp.where(row_id == j, rows[j], chunk)
        # One full (8, Ct) store: whole (8,128) vregs when Ct is a multiple of 128.
        o_ref[pl.ds(t0, _CHUNK), :] = chunk
        return carry

    lax.fori_loop(0, n_chunks, chunk_body, 0)

    # Static tail when HW is not a multiple of 8 (e.g. 14*14 = 196): unrolled.
    for j in range(rem):
        t = n_chunks * _CHUNK + j
        o_ref[pl.ds(t, 1), :] = x_ref[pl.ds(tok_ref[d, t], 1), :]


# ------------------------ tiling / budget helpers ---------------------------

def _vmem_budget_bytes():
    # Generation-aware-ish budget for (x block + out block) * double buffering.
    try:
        cap = int(pltpu.get_tpu_info().vmem_capacity_bytes)
    except Exception:
        cap = 64 << 20  # be conservative (v7x per-TC VMEM)
    return min(20 << 20, cap // 3)


def _choose_c_tile(HW, C, itemsize, budget):
    """Pick Ct (last-dim tile) so 4 * HW * Ct * itemsize fits the budget."""
    def need(ct):
        return 4 * HW * ct * itemsize
    if need(C) <= budget:
        return C
    if C % 128 != 0 or C <= 128:
        # Non-tileable lane dim: fall back to full C (vmem_limit bumped below).
        # TODO(synk): pad C to a multiple of 128 for very large non-aligned C.
        return C
    ct = max(128, (budget // (4 * HW * itemsize)) // 128 * 128)
    ct = min(ct, C)
    while C % ct != 0 and ct > 128:
        ct -= 128
    return ct


def gather_directions(tok_tbl, x):
    """tok_tbl: (n_dirs, HW) int32, x: (B, HW, C)  ->  (n_dirs, B, HW, C)."""
    n_dirs, HW = tok_tbl.shape
    B, HW2, C = x.shape
    assert HW == HW2
    itemsize = int(np.dtype(x.dtype).itemsize)

    ct = _choose_c_tile(HW, C, itemsize, _vmem_budget_bytes())
    n_ct = pl.cdiv(C, ct)

    blk_bytes = HW * ct * itemsize
    # x block + out block, each double-buffered by the pipeline, plus slack.
    vmem_limit = int(max(4 * blk_bytes + (2 << 20), 4 << 20))
    total_bytes = B * HW * C * itemsize

    return pl.pallas_call(
        _gather_kernel,
        out_shape=jax.ShapeDtypeStruct((n_dirs, B, HW, C), x.dtype),
        grid_spec=pltpu.PrefetchScalarGridSpec(
            num_scalar_prefetch=1,
            # Directions innermost: the x block index is constant across d, so
            # each (b, ct) tile of x is DMA'd from HBM exactly once.
            grid=(B, n_ct, n_dirs),
            in_specs=[
                pl.BlockSpec((None, HW, ct), lambda b, c, d, tok: (b, 0, c)),
            ],
            out_specs=pl.BlockSpec((None, None, HW, ct),
                                   lambda b, c, d, tok: (d, b, 0, c)),
        ),
        compiler_params=pltpu.CompilerParams(
            # All grid points write disjoint output blocks -> fully parallel;
            # the extra (B, C-tile) axes give v7x's 2 TCs balanced work.
            dimension_semantics=("parallel", "parallel", "parallel"),
            vmem_limit_bytes=vmem_limit,
        ),
        cost_estimate=pl.CostEstimate(
            flops=0,
            transcendentals=0,
            bytes_accessed=int((1 + n_dirs) * total_bytes + tok_tbl.size * 4),
        ),
    )(tok_tbl, x)


# ------------------------------ Module wrapper ------------------------------

class SquenceMultiDirection:
    """JAX/Pallas version of the PyTorch module (norm_layer=None -> Identity)."""

    def __init__(self, img_size=224, patch_size=16, in_c=3, embed_dim=768,
                 norm_layer=None):
        # norm_layer default is None -> Identity (no learned parameters).
        self.norm = lambda a: a
        self._table_cache = {}  # (H, W) -> device-resident (6, HW) int32 table

    def _tables(self, H, W):
        key = (H, W)
        if key not in self._table_cache:
            self._table_cache[key] = jnp.asarray(_build_token_tables(H, W))
        return self._table_cache[key]

    def __call__(self, x):
        B, HW, C = x.shape
        H = W = int(np.sqrt(HW))
        assert H * W == HW, "HW must be a perfect square"
        # NOTE: C < 128 (or C not a multiple of 128) means lane-masked stores
        # inside the kernel; production C (e.g. 768) is lane-dense.

        tok = self._tables(H, W)                 # (6, HW) int32, cached on device
        slabs = gather_directions(tok, x)        # (6, B, HW, C)  -- Pallas gather

        rl, tb_pre = slabs[0], slabs[1]
        d5, d6, d7, d8 = slabs[2], slabs[3], slabs[4], slabs[5]

        # Fixed per-column (H, C) <-> (C, H) relayout for the reshape-semantics
        # top_to_bottom, then bottom_to_top as its token reversal.
        # TODO(synk): dense relayout (no gather component) left to XLA.
        tb = tb_pre.reshape(B, W, H, C).transpose(0, 1, 3, 2).reshape(B, HW, C)
        bt = tb[:, ::-1, :]

        outputs = {
            "left_to_right": x,          # identity direction: no kernel work
            "right_to_left": rl,
            "top_to_bottom": tb,
            "bottom_to_top": bt,
            "top_left_to_bottom_right": d5,
            "bottom_right_to_top_left": d6,
            "top_right_to_bottom_left": d7,
            "bottom_left_to_top_right": d8,
        }
        return {name: self.norm(val) for name, val in outputs.items()}


# ----------------------------------- main -----------------------------------

if __name__ == "__main__":
    key = jax.random.PRNGKey(0)
    B, H, W, C = 2, 8, 8, 8           # small shapes: tokens HW=64, embed C=8
    HW = H * W
    x = jax.random.normal(key, (B, HW, C), dtype=jnp.float32)

    module = SquenceMultiDirection()
    outputs = module(x)
    outputs = jax.block_until_ready(outputs)

    # Correctness check against the pure-numpy mirror of the torch forward.
    x_np = np.asarray(x)
    for b in range(B):
        ref_dirs = _directions_2d(x_np[b], H, W)
        for name, ref in zip(DIRECTION_NAMES, ref_dirs):
            got = np.asarray(outputs[name][b])
            np.testing.assert_allclose(got, ref, rtol=0.0, atol=0.0)

    print("KERNEL_OK")
</pallas_src>

<mosaic_0001>
module attributes {stable_mosaic.version = 11 : i64} {
  func.func @_gather_kernel(%arg0: i32, %arg1: i32, %arg2: i32, %arg3: memref<6x64xi32, #tpu.memory_space<smem>>, %arg4: memref<1x64x8xf32, #tpu.memory_space<vmem>>, %arg5: memref<1x1x64x8xf32, #tpu.memory_space<vmem>>) attributes {dimension_semantics = [#tpu.dimension_semantics<parallel>, #tpu.dimension_semantics<parallel>, #tpu.dimension_semantics<parallel>], iteration_bounds = array<i64: 2, 1, 6>, scalar_prefetch = 1 : i64, scratch_operands = 0 : i64, tpu.core_type = #tpu.core_type<tc>, window_params = [{transform_indices = @transform_0, window_bounds = array<i64: 1, 64, 8>}, {transform_indices = @transform_1, window_bounds = array<i64: 1, 1, 64, 8>}]} {
    %0 = tpu.iota {dimensions = array<i32: 0>} : vector<8x8xi32>
    %c0_i32 = arith.constant 0 : i32
    %c8_i32 = arith.constant 8 : i32
    %1 = arith.addi %c0_i32, %c8_i32 : i32
    %c1_i32 = arith.constant 1 : i32
    scf.for %arg6 = %c0_i32 to %1 step %c1_i32  : i32 {
      %c8_i32_1 = arith.constant 8 : i32
      %2 = arith.muli %arg6, %c8_i32_1 : i32
      %3 = tpu.assume_multiple %2, 8 : i32
      %c0_i32_2 = arith.constant 0 : i32
      %4 = arith.addi %3, %c0_i32_2 : i32
      %5 = arith.index_cast %arg2 : i32 to index
      %6 = arith.index_cast %4 : i32 to index
      %7 = memref.load %arg3[%5, %6] : memref<6x64xi32, #tpu.memory_space<smem>>
      %c0 = arith.constant 0 : index
      %8 = arith.index_cast %7 : i32 to index
      %c0_3 = arith.constant 0 : index
      %9 = vector.load %arg4[%c0, %8, %c0_3] : memref<1x64x8xf32, #tpu.memory_space<vmem>>, vector<1x1x8xf32>
      %10 = vector.shape_cast %9 : vector<1x1x8xf32> to vector<1x8xf32>
      %c1_i32_4 = arith.constant 1 : i32
      %11 = arith.addi %3, %c1_i32_4 : i32
      %12 = arith.index_cast %arg2 : i32 to index
      %13 = arith.index_cast %11 : i32 to index
      %14 = memref.load %arg3[%12, %13] : memref<6x64xi32, #tpu.memory_space<smem>>
      %c0_5 = arith.constant 0 : index
      %15 = arith.index_cast %14 : i32 to index
      %c0_6 = arith.constant 0 : index
      %16 = vector.load %arg4[%c0_5, %15, %c0_6] : memref<1x64x8xf32, #tpu.memory_space<vmem>>, vector<1x1x8xf32>
      %17 = vector.shape_cast %16 : vector<1x1x8xf32> to vector<1x8xf32>
      %c2_i32 = arith.constant 2 : i32
      %18 = arith.addi %3, %c2_i32 : i32
      %19 = arith.index_cast %arg2 : i32 to index
      %20 = arith.index_cast %18 : i32 to index
      %21 = memref.load %arg3[%19, %20] : memref<6x64xi32, #tpu.memory_space<smem>>
      %c0_7 = arith.constant 0 : index
      %22 = arith.index_cast %21 : i32 to index
      %c0_8 = arith.constant 0 : index
      %23 = vector.load %arg4[%c0_7, %22, %c0_8] : memref<1x64x8xf32, #tpu.memory_space<vmem>>, vector<1x1x8xf32>
      %24 = vector.shape_cast %23 : vector<1x1x8xf32> to vector<1x8xf32>
      %c3_i32 = arith.constant 3 : i32
      %25 = arith.addi %3, %c3_i32 : i32
      %26 = arith.index_cast %arg2 : i32 to index
      %27 = arith.index_cast %25 : i32 to index
      %28 = memref.load %arg3[%26, %27] : memref<6x64xi32, #tpu.memory_space<smem>>
      %c0_9 = arith.constant 0 : index
      %29 = arith.index_cast %28 : i32 to index
      %c0_10 = arith.constant 0 : index
      %30 = vector.load %arg4[%c0_9, %29, %c0_10] : memref<1x64x8xf32, #tpu.memory_space<vmem>>, vector<1x1x8xf32>
      %31 = vector.shape_cast %30 : vector<1x1x8xf32> to vector<1x8xf32>
      %c4_i32 = arith.constant 4 : i32
      %32 = arith.addi %3, %c4_i32 : i32
      %33 = arith.index_cast %arg2 : i32 to index
      %34 = arith.index_cast %32 : i32 to index
      %35 = memref.load %arg3[%33, %34] : memref<6x64xi32, #tpu.memory_space<smem>>
      %c0_11 = arith.constant 0 : index
      %36 = arith.index_cast %35 : i32 to index
      %c0_12 = arith.constant 0 : index
      %37 = vector.load %arg4[%c0_11, %36, %c0_12] : memref<1x64x8xf32, #tpu.memory_space<vmem>>, vector<1x1x8xf32>
      %38 = vector.shape_cast %37 : vector<1x1x8xf32> to vector<1x8xf32>
      %c5_i32 = arith.constant 5 : i32
      %39 = arith.addi %3, %c5_i32 : i32
      %40 = arith.index_cast %arg2 : i32 to index
      %41 = arith.index_cast %39 : i32 to index
      %42 = memref.load %arg3[%40, %41] : memref<6x64xi32, #tpu.memory_space<smem>>
      %c0_13 = arith.constant 0 : index
      %43 = arith.index_cast %42 : i32 to index
      %c0_14 = arith.constant 0 : index
      %44 = vector.load %arg4[%c0_13, %43, %c0_14] : memref<1x64x8xf32, #tpu.memory_space<vmem>>, vector<1x1x8xf32>
      %45 = vector.shape_cast %44 : vector<1x1x8xf32> to vector<1x8xf32>
      %c6_i32 = arith.constant 6 : i32
      %46 = arith.addi %3, %c6_i32 : i32
      %47 = arith.index_cast %arg2 : i32 to index
      %48 = arith.index_cast %46 : i32 to index
      %49 = memref.load %arg3[%47, %48] : memref<6x64xi32, #tpu.memory_space<smem>>
      %c0_15 = arith.constant 0 : index
      %50 = arith.index_cast %49 : i32 to index
      %c0_16 = arith.constant 0 : index
      %51 = vector.load %arg4[%c0_15, %50, %c0_16] : memref<1x64x8xf32, #tpu.memory_space<vmem>>, vector<1x1x8xf32>
      %52 = vector.shape_cast %51 : vector<1x1x8xf32> to vector<1x8xf32>
      %c7_i32 = arith.constant 7 : i32
      %53 = arith.addi %3, %c7_i32 : i32
      %54 = arith.index_cast %arg2 : i32 to index
      %55 = arith.index_cast %53 : i32 to index
      %56 = memref.load %arg3[%54, %55] : memref<6x64xi32, #tpu.memory_space<smem>>
      %c0_17 = arith.constant 0 : index
      %57 = arith.index_cast %56 : i32 to index
      %c0_18 = arith.constant 0 : index
      %58 = vector.load %arg4[%c0_17, %57, %c0_18] : memref<1x64x8xf32, #tpu.memory_space<vmem>>, vector<1x1x8xf32>
      %59 = vector.shape_cast %58 : vector<1x1x8xf32> to vector<1x8xf32>
      %60 = vector.shape_cast %10 : vector<1x8xf32> to vector<1x8xf32>
      %61 = vector.broadcast %60 : vector<1x8xf32> to vector<8x8xf32>
      %c1_i32_19 = arith.constant 1 : i32
      %62 = vector.broadcast %c1_i32_19 : i32 to vector<8x8xi32>
      %63 = arith.cmpi eq, %0, %62 : vector<8x8xi32>
      %64 = vector.shape_cast %17 : vector<1x8xf32> to vector<1x8xf32>
      %65 = vector.broadcast %64 : vector<1x8xf32> to vector<8x8xf32>
      %66 = arith.select %63, %65, %61 : vector<8x8xi1>, vector<8x8xf32>
      %c2_i32_20 = arith.constant 2 : i32
      %67 = vector.broadcast %c2_i32_20 : i32 to vector<8x8xi32>
      %68 = arith.cmpi eq, %0, %67 : vector<8x8xi32>
      %69 = vector.shape_cast %24 : vector<1x8xf32> to vector<1x8xf32>
      %70 = vector.broadcast %69 : vector<1x8xf32> to vector<8x8xf32>
      %71 = arith.select %68, %70, %66 : vector<8x8xi1>, vector<8x8xf32>
      %c3_i32_21 = arith.constant 3 : i32
      %72 = vector.broadcast %c3_i32_21 : i32 to vector<8x8xi32>
      %73 = arith.cmpi eq, %0, %72 : vector<8x8xi32>
      %74 = vector.shape_cast %31 : vector<1x8xf32> to vector<1x8xf32>
      %75 = vector.broadcast %74 : vector<1x8xf32> to vector<8x8xf32>
      %76 = arith.select %73, %75, %71 : vector<8x8xi1>, vector<8x8xf32>
      %c4_i32_22 = arith.constant 4 : i32
      %77 = vector.broadcast %c4_i32_22 : i32 to vector<8x8xi32>
      %78 = arith.cmpi eq, %0, %77 : vector<8x8xi32>
      %79 = vector.shape_cast %38 : vector<1x8xf32> to vector<1x8xf32>
      %80 = vector.broadcast %79 : vector<1x8xf32> to vector<8x8xf32>
      %81 = arith.select %78, %80, %76 : vector<8x8xi1>, vector<8x8xf32>
      %c5_i32_23 = arith.constant 5 : i32
      %82 = vector.broadcast %c5_i32_23 : i32 to vector<8x8xi32>
      %83 = arith.cmpi eq, %0, %82 : vector<8x8xi32>
      %84 = vector.shape_cast %45 : vector<1x8xf32> to vector<1x8xf32>
      %85 = vector.broadcast %84 : vector<1x8xf32> to vector<8x8xf32>
      %86 = arith.select %83, %85, %81 : vector<8x8xi1>, vector<8x8xf32>
      %c6_i32_24 = arith.constant 6 : i32
      %87 = vector.broadcast %c6_i32_24 : i32 to vector<8x8xi32>
      %88 = arith.cmpi eq, %0, %87 : vector<8x8xi32>
      %89 = vector.shape_cast %52 : vector<1x8xf32> to vector<1x8xf32>
      %90 = vector.broadcast %89 : vector<1x8xf32> to vector<8x8xf32>
      %91 = arith.select %88, %90, %86 : vector<8x8xi1>, vector<8x8xf32>
      %c7_i32_25 = arith.constant 7 : i32
      %92 = vector.broadcast %c7_i32_25 : i32 to vector<8x8xi32>
      %93 = arith.cmpi eq, %0, %92 : vector<8x8xi32>
      %94 = vector.shape_cast %59 : vector<1x8xf32> to vector<1x8xf32>
      %95 = vector.broadcast %94 : vector<1x8xf32> to vector<8x8xf32>
      %96 = arith.select %93, %95, %91 : vector<8x8xi1>, vector<8x8xf32>
      %c0_26 = arith.constant 0 : index
      %c0_27 = arith.constant 0 : index
      %97 = arith.index_cast %3 : i32 to index
      %c0_28 = arith.constant 0 : index
      %98 = vector.load %arg5[%c0_26, %c0_27, %97, %c0_28] : memref<1x1x64x8xf32, #tpu.memory_space<vmem>>, vector<1x1x8x8xf32>
      %99 = vector.shape_cast %98 : vector<1x1x8x8xf32> to vector<8x8xf32>
      %100 = vector.shape_cast %96 : vector<8x8xf32> to vector<1x1x8x8xf32>
      tpu.vector_store %arg5[%c0_26, %c0_27, %97, %c0_28], %100 {strides = array<i32>} : memref<1x1x64x8xf32, #tpu.memory_space<vmem>>, vector<1x1x8x8xf32>,
    }
    %c8_i32_0 = arith.constant 8 : i32
    return
  }
  func.func @transform_0(%arg0: i32, %arg1: i32, %arg2: i32, %arg3: memref<6x64xi32, #tpu.memory_space<smem>>) -> (i32, i32, i32) {
    %c0_i32 = arith.constant 0 : i32
    %c0_i32_0 = arith.constant 0 : i32
    return %arg0, %c0_i32, %arg1 : i32, i32, i32
  }
  func.func @transform_1(%arg0: i32, %arg1: i32, %arg2: i32, %arg3: memref<6x64xi32, #tpu.memory_space<smem>>) -> (i32, i32, i32, i32) {
    %c0_i32 = arith.constant 0 : i32
    %c0_i32_0 = arith.constant 0 : i32
    return %arg2, %arg0, %c0_i32, %arg1 : i32, i32, i32, i32
  }
}

</mosaic_0001>

<llo_original>
// kernel: tpu_custom_call.1
$region0: #{tpu_custom_call.1}
  #allocation0 [shape = 'u32[]', space=smem, size = 0x4, offset = 0x4, fixed_abs, tag = 'smem constant byte address 0x4 - core index']
  #allocation1 [shape = 'u32[72,128]{1,0:T(1,128)}', space=vmem, size = 0x9000, scoped, tag = 'internal scratch']
  #allocation2 [shape = 's32[1]{0}', space=sflag, size = 0x4, scoped, tag = 'scoped memory for tpu_custom_call.1']
  #allocation3 [shape = 'u8[4096]{0}', space=smem, size = 0x1000, scoped, tag = 'prefetched SMEM operand 0']
  %s0 = inlined_call_operand.vmem [shape: s32[6,64], index: 0, kind: input, shape index: {}]
  %s1 = inlined_call_operand.vmem [shape: f32[2,64,8], index: 1, kind: input, shape index: {}]
  %s2 = inlined_call_operand.vmem [shape: f32[6,2,64,8], index: 2, kind: output, shape index: {}]
  %s3 = sld [smem:[#allocation0]]
  $region44: #{tpu_custom_call.1} parent=0
    _
  %s5 = ssub.s32 1, %s3
  %s6 = scalar_select 0, %s5, %s3
  %s8 = sshll.u32 %s0, 4
  %s9 = int_to_ptr.vmem [resolvable:$true] %s8
  %11 = dma.vmem_to_smem %s9, 128, [#allocation3], [#allocation2]
  %13 = dma.done [#allocation2], 128
  %14 = sfence
  loop: start=0, step=1, limit=14
  $region2: #{tpu_custom_call.1} parent=0 // loop_pre_header
    _
  $region3: #{tpu_custom_call.1} parent=0 // loop_header
    %s16 = sphi 0, %s20
    %p17 = scmp.ge.s32.totalorder %s16, 14
    %s23 = sphi 0, %s42
    %s24 = sphi 0, %s38
    %s25 = sphi 0, %s34
    %s26 = sphi 0, %s23
    %s27 = sphi 0, %s24
    %s28 = sphi 0, %s25
    %s29 = sphi 0, %s26
    %s30 = sphi 0, %s27
    %s31 = sphi 0, %s28
    %s47 = sphi 0, %s49
    %s50 = sphi 0, %s47
    %s51 = sphi 0, %s50
    %s67 = sphi 0, %s51
    %s77 = sphi 0, %s79
    %s80 = sphi 0, %s77
    %s81 = sphi 0, %s80
    %s97 = sphi 0, %s81
  $region4: #{tpu_custom_call.1} parent=0 // loop_header_branch
    %19 = sbr.rel (%p17) target = $region8
  $region5: #{tpu_custom_call.1} parent=0 // loop_body
    %s21 = ssub.s32 %s16, 1
    %s22 = ssub.s32 %s16, 2
    %s32 = sadd.s32 1, %s25
    %p33 = scmp.ge.s32.totalorder %s32, 6
    %s34 = scalar_select %p33, 0, %s32
    %s35 = sadd.s32 1, %s24
    %s36 = scalar_select %p33, %s35, %s24
    %p37 = scmp.ge.s32.totalorder %s36, 1
    %s38 = scalar_select %p37, 0, %s36
    %s39 = sadd.s32 1, %s23
    %s40 = scalar_select %p37, %s39, %s23
    %p41 = scmp.ge.s32.totalorder %s40, 2
    %s42 = scalar_select %p41, 0, %s40
    %s43 = ssub.s32 %s23, %s42
    %s44 = ssub.s32 %s24, %s38
    %s45 = sor.u32 %s43, %s44
    %p46 = scmp.eq.s32.totalorder %s45, 0
    %s48 = sadd.s32 %s47, 1
    %s49 = scalar_select %p46, %s47, %s48
    %p52 = pneg %p46
    %p53 = scmp.eq.s32.totalorder %s16, 11
    %p54 = por %p52, %p53
    %p55 = scmp.ne.s32.totalorder %s47, %s50
    %p56 = scmp.eq.s32.totalorder %s16, 0
    %p57 = por %p55, %p56
    %p58 = scmp.ne.s32.totalorder %s47, %s50
    %p59 = scmp.eq.s32.totalorder %s21, 11
    %p60 = por %p58, %p59
    %p61 = scmp.ne.s32.totalorder %s50, %s51
    %p62 = scmp.eq.s32.totalorder %s21, 0
    %p63 = por %p61, %p62
    %p64 = scmp.ne.s32.totalorder %s50, %s51
    %p65 = scmp.eq.s32.totalorder %s22, 11
    %p66 = por %p64, %p65
    %p68 = scmp.ne.s32.totalorder %s51, %s67
    %p69 = scmp.eq.s32.totalorder %s22, 0
    %p70 = por %p68, %p69
    %s71 = ssub.s32 %s25, %s34
    %s72 = ssub.s32 %s23, %s42
    %s73 = sor.u32 %s71, %s72
    %s74 = ssub.s32 %s24, %s38
    %s75 = sor.u32 %s73, %s74
    %p76 = scmp.eq.s32.totalorder %s75, 0
    %s78 = sadd.s32 %s77, 1
    %s79 = scalar_select %p76, %s77, %s78
    %p82 = pneg %p76
    %p83 = scmp.eq.s32.totalorder %s16, 11
    %p84 = por %p82, %p83
    %p85 = scmp.ne.s32.totalorder %s77, %s80
    %p86 = scmp.eq.s32.totalorder %s16, 0
    %p87 = por %p85, %p86
    %p88 = scmp.ne.s32.totalorder %s77, %s80
    %p89 = scmp.eq.s32.totalorder %s21, 11
    %p90 = por %p88, %p89
    %p91 = scmp.ne.s32.totalorder %s80, %s81
    %p92 = scmp.eq.s32.totalorder %s21, 0
    %p93 = por %p91, %p92
    %p94 = scmp.ne.s32.totalorder %s80, %s81
    %p95 = scmp.eq.s32.totalorder %s22, 11
    %p96 = por %p94, %p95
    %p98 = scmp.ne.s32.totalorder %s81, %s97
    %p99 = scmp.eq.s32.totalorder %s22, 0
    %p100 = por %p98, %p99
    %p101 = scmp.le.s32.totalorder 1, %s16
    %p102 = scmp.lt.s32.totalorder %s16, 13
    %p103 = pnand %p101, %p102
    %p104 = pneg %p103
    // Predicated region
    $region9: #{tpu_custom_call.1} parent=5 // pred_check
      _
    $region10: #{tpu_custom_call.1} parent=5 // pred_check_branch
      %106 = sbr.rel (%p103) target = $region12
    $region11: #{tpu_custom_call.1} parent=5 // pred_region
      %s107 = ssub.s32 %s16, 1
    $region12: #{tpu_custom_call.1} parent=5 // pred_fallthru
      _
    %p108 = scmp.lt.s32.totalorder %s16, 12
    // Predicated region
    $region13: #{tpu_custom_call.1} parent=5 // pred_check
      %p109 = pneg %p108
    $region14: #{tpu_custom_call.1} parent=5 // pred_check_branch
      %111 = sbr.rel (%p109) target = $region16
    $region15: #{tpu_custom_call.1} parent=5 // pred_region
      // Predicated region
      $region17: #{tpu_custom_call.1} parent=15 // pred_check
        %p112 = pneg %p57
      $region18: #{tpu_custom_call.1} parent=15 // pred_check_branch
        %114 = sbr.rel (%p112) target = $region20
      $region19: #{tpu_custom_call.1} parent=15 // pred_region
        %p115 = scmp.lt.s32.totalorder %s23, 1
        %s116 = scalar_select %p115, %s23, 1
        %p117 = scmp.lt.s32.totalorder %s24, 0
        %s118 = scalar_select %p117, %s24, 0
        %s119 = smul.addr %s116, 8
        %s120 = sadd.s32 %s118, %s119
        %s121 = smul.addr %s120, 8
        %s122 = scalar_lea.vmem %s1, %s121
      $region20: #{tpu_custom_call.1} parent=15 // pred_fallthru
        _
    $region16: #{tpu_custom_call.1} parent=5 // pred_fallthru
      _
    %p123 = scmp.le.s32.totalorder 1, %s16
    %p124 = scmp.lt.s32.totalorder %s16, 13
    %p125 = pnand %p123, %p124
    %p126 = pneg %p125
    // Predicated region
    $region21: #{tpu_custom_call.1} parent=5 // pred_check
      _
    $region22: #{tpu_custom_call.1} parent=5 // pred_check_branch
      %128 = sbr.rel (%p125) target = $region24
    $region23: #{tpu_custom_call.1} parent=5 // pred_region
      %s129 = ssub.s32 %s16, 1
      %p130 = scmp.lt.s32.totalorder %s26, 1
      %s131 = scalar_select %p130, %s26, 1
      %p132 = scmp.lt.s32.totalorder %s27, 0
      %s133 = scalar_select %p132, %s27, 0
      %s134 = smul.addr %s131, 8
      %s135 = sadd.s32 %s133, %s134
      %s136 = smul.addr %s135, 8
      %s137 = scalar_lea.vmem %s1, %s136
      %p138 = pneg %p63
      %p139 = pneg %p60
      %p140 = pneg %p93
      %p141 = pneg %p90
      %p142 = scmp.lt.s32.totalorder %s28, 5
      %s143 = scalar_select %p142, %s28, 5
      %p144 = scmp.lt.s32.totalorder %s26, 1
      %s145 = scalar_select %p144, %s26, 1
      %p146 = scmp.lt.s32.totalorder %s27, 0
      %s147 = scalar_select %p146, %s27, 0
      %s148 = smul.addr %s145, 8
      %s149 = sadd.s32 %s147, %s148
      %s150 = smul.addr %s143, 16
      %s151 = sadd.s32 %s149, %s150
      %s152 = smul.addr %s151, 8
      %s153 = scalar_lea.vmem %s2, %s152
      %p154 = scmp.lt.s32.totalorder %s26, 1
      %s155 = scalar_select %p154, %s26, 1
      %p156 = scmp.lt.s32.totalorder %s27, 0
      %s157 = scalar_select %p156, %s27, 0
      %s158 = smul.addr %s155, 8
      %s159 = sadd.s32 %s157, %s158
      %s160 = smul.addr %s159, 8
      %s161 = scalar_lea.vmem %s1, %s160
      %p162 = scmp.lt.s32.totalorder %s28, 5
      %s163 = scalar_select %p162, %s28, 5
      %p164 = scmp.lt.s32.totalorder %s26, 1
      %s165 = scalar_select %p164, %s26, 1
      %p166 = scmp.lt.s32.totalorder %s27, 0
      %s167 = scalar_select %p166, %s27, 0
      %s168 = smul.addr %s165, 8
      %s169 = sadd.s32 %s167, %s168
      %s170 = smul.addr %s163, 16
      %s171 = sadd.s32 %s169, %s170
      %s172 = smul.addr %s171, 8
      %s173 = scalar_lea.vmem %s2, %s172
      %v174 = vlaneseq
      %v175 = vshrl.u32 %v174, 7
      loop: start=0, step=1, limit=8
      $region25: #{tpu_custom_call.1} parent=23 // loop_pre_header
        _
      $region26: #{tpu_custom_call.1} parent=23 // loop_header
        %s177 = sphi 0, %s181
        %p178 = scmp.ge.s32.totalorder %s177, 8
      $region27: #{tpu_custom_call.1} parent=23 // loop_header_branch
        %180 = sbr.rel (%p178) target = $region31
      $region28: #{tpu_custom_call.1} parent=23 // loop_body
        %s182 = smul.u32 %s177, 8
        %s183 = sshra.s32 %s182, 7
        %s184 = sand.u32 %s182, 127
        %s185 = sadd.s32 %s183, %s28
        %s186 = smul.u32 %s185, 128
        %s187 = sshra.s32 %s182, 7
        %s188 = sand.u32 %s182, 127
        %s189 = sadd.s32 %s186, %s188
        %s190 = sld [smem:[#allocation3 + %s189]]
        %s191 = scalar_lea.vmem %s161, %s190
        %v192 = vld [vmem:[%s191] sm:$0x1]
        %s193 = sadd.s32 %s182, 1
        %s194 = sshra.s32 %s193, 7
        %s195 = sand.u32 %s193, 127
        %s196 = sadd.s32 %s194, %s28
        %s197 = smul.u32 %s196, 128
        %s198 = sshra.s32 %s193, 7
        %s199 = sand.u32 %s193, 127
        %s200 = sadd.s32 %s197, %s199
        %s201 = sld [smem:[#allocation3 + %s200]]
        %s202 = scalar_lea.vmem %s161, %s201
        %v203 = vld [vmem:[%s202] sm:$0x1]
        %s204 = sadd.s32 %s182, 2
        %s205 = sshra.s32 %s204, 7
        %s206 = sand.u32 %s204, 127
        %s207 = sadd.s32 %s205, %s28
        %s208 = smul.u32 %s207, 128
        %s209 = sshra.s32 %s204, 7
        %s210 = sand.u32 %s204, 127
        %s211 = sadd.s32 %s208, %s210
        %s212 = sld [smem:[#allocation3 + %s211]]
        %s213 = scalar_lea.vmem %s161, %s212
        %v214 = vld [vmem:[%s213] sm:$0x1]
        %s215 = sadd.s32 %s182, 3
        %s216 = sshra.s32 %s215, 7
        %s217 = sand.u32 %s215, 127
        %s218 = sadd.s32 %s216, %s28
        %s219 = smul.u32 %s218, 128
        %s220 = sshra.s32 %s215, 7
        %s221 = sand.u32 %s215, 127
        %s222 = sadd.s32 %s219, %s221
        %s223 = sld [smem:[#allocation3 + %s222]]
        %s224 = scalar_lea.vmem %s161, %s223
        %v225 = vld [vmem:[%s224] sm:$0x1]
        %s226 = sadd.s32 %s182, 4
        %s227 = sshra.s32 %s226, 7
        %s228 = sand.u32 %s226, 127
        %s229 = sadd.s32 %s227, %s28
        %s230 = smul.u32 %s229, 128
        %s231 = sshra.s32 %s226, 7
        %s232 = sand.u32 %s226, 127
        %s233 = sadd.s32 %s230, %s232
        %s234 = sld [smem:[#allocation3 + %s233]]
        %s235 = scalar_lea.vmem %s161, %s234
        %v236 = vld [vmem:[%s235] sm:$0x1]
        %s237 = sadd.s32 %s182, 5
        %s238 = sshra.s32 %s237, 7
        %s239 = sand.u32 %s237, 127
        %s240 = sadd.s32 %s238, %s28
        %s241 = smul.u32 %s240, 128
        %s242 = sshra.s32 %s237, 7
        %s243 = sand.u32 %s237, 127
        %s244 = sadd.s32 %s241, %s243
        %s245 = sld [smem:[#allocation3 + %s244]]
        %s246 = scalar_lea.vmem %s161, %s245
        %v247 = vld [vmem:[%s246] sm:$0x1]
        %s248 = sadd.s32 %s182, 6
        %s249 = sshra.s32 %s248, 7
        %s250 = sand.u32 %s248, 127
        %s251 = sadd.s32 %s249, %s28
        %s252 = smul.u32 %s251, 128
        %s253 = sshra.s32 %s248, 7
        %s254 = sand.u32 %s248, 127
        %s255 = sadd.s32 %s252, %s254
        %s256 = sld [smem:[#allocation3 + %s255]]
        %s257 = scalar_lea.vmem %s161, %s256
        %v258 = vld [vmem:[%s257] sm:$0x1]
        %s259 = sadd.s32 %s182, 7
        %s260 = sshra.s32 %s259, 7
        %s261 = sand.u32 %s259, 127
        %s262 = sadd.s32 %s260, %s28
        %s263 = smul.u32 %s262, 128
        %s264 = sshra.s32 %s259, 7
        %s265 = sand.u32 %s259, 127
        %s266 = sadd.s32 %s263, %s265
        %s267 = sld [smem:[#allocation3 + %s266]]
        %s268 = scalar_lea.vmem %s161, %s267
        %v269 = vld [vmem:[%s268] sm:$0x1]
        %v270 = vperm.slane %v192, 0
        %vm271 = vcmp.eq.s32.totalorder %v175, 1
        %v272 = vperm.slane %v203, 0
        %v273 = vsel %vm271, %v272, %v270
        %vm274 = vcmp.eq.s32.totalorder %v175, 2
        %v275 = vperm.slane %v214, 0
        %v276 = vsel %vm274, %v275, %v273
        %vm277 = vcmp.eq.s32.totalorder %v175, 3
        %v278 = vperm.slane %v225, 0
        %v279 = vsel %vm277, %v278, %v276
        %vm280 = vcmp.eq.s32.totalorder %v175, 4
        %v281 = vperm.slane %v236, 0
        %v282 = vsel %vm280, %v281, %v279
        %vm283 = vcmp.eq.s32.totalorder %v175, 5
        %v284 = vperm.slane %v247, 0
        %v285 = vsel %vm283, %v284, %v282
        %vm286 = vcmp.eq.s32.totalorder %v175, 6
        %v287 = vperm.slane %v258, 0
        %v288 = vsel %vm286, %v287, %v285
        %vm289 = vcmp.eq.s32.totalorder %v175, 7
        %v290 = vperm.slane %v269, 0
        %v291 = vsel %vm289, %v290, %v288
        %s292 = scalar_lea.vmem %s173, %s182
        %vm293 = vcmask 64512
        %294 = vst.msk [vmem:[%s292] sm:$0xff] %vm293, %v291
      $region29: #{tpu_custom_call.1} parent=23 // loop_footer
        %s181 = sadd.s32 1, %s177
      $region30: #{tpu_custom_call.1} parent=23 // loop_footer_branch
        %176 = sbr.rel target = $region26
      $region31: #{tpu_custom_call.1} parent=23 // loop_exit
        _
      %p295 = scmp.lt.s32.totalorder %s28, 5
      %s296 = scalar_select %p295, %s28, 5
      %p297 = scmp.lt.s32.totalorder %s26, 1
      %s298 = scalar_select %p297, %s26, 1
      %p299 = scmp.lt.s32.totalorder %s27, 0
      %s300 = scalar_select %p299, %s27, 0
      %s301 = smul.addr %s298, 8
      %s302 = sadd.s32 %s300, %s301
      %s303 = smul.addr %s296, 16
      %s304 = sadd.s32 %s302, %s303
      %s305 = smul.addr %s304, 8
      %s306 = scalar_lea.vmem %s2, %s305
      // Predicated region
      $region32: #{tpu_custom_call.1} parent=23 // pred_check
        %p307 = pneg %p90
      $region33: #{tpu_custom_call.1} parent=23 // pred_check_branch
        %309 = sbr.rel (%p307) target = $region35
      $region34: #{tpu_custom_call.1} parent=23 // pred_region
        _
      $region35: #{tpu_custom_call.1} parent=23 // pred_fallthru
        _
    $region24: #{tpu_custom_call.1} parent=5 // pred_fallthru
      _
    %p310 = scmp.le.s32.totalorder 2, %s16
    // Predicated region
    $region36: #{tpu_custom_call.1} parent=5 // pred_check
      %p311 = pneg %p310
    $region37: #{tpu_custom_call.1} parent=5 // pred_check_branch
      %313 = sbr.rel (%p311) target = $region39
    $region38: #{tpu_custom_call.1} parent=5 // pred_region
      %s314 = ssub.s32 %s16, 2
      // Predicated region
      $region40: #{tpu_custom_call.1} parent=38 // pred_check
        %p315 = pneg %p96
      $region41: #{tpu_custom_call.1} parent=38 // pred_check_branch
        %317 = sbr.rel (%p315) target = $region43
      $region42: #{tpu_custom_call.1} parent=38 // pred_region
        %p318 = scmp.lt.s32.totalorder %s31, 5
        %s319 = scalar_select %p318, %s31, 5
        %p320 = scmp.lt.s32.totalorder %s29, 1
        %s321 = scalar_select %p320, %s29, 1
        %p322 = scmp.lt.s32.totalorder %s30, 0
        %s323 = scalar_select %p322, %s30, 0
        %s324 = smul.addr %s321, 8
        %s325 = sadd.s32 %s323, %s324
        %s326 = smul.addr %s319, 16
        %s327 = sadd.s32 %s325, %s326
        %s328 = smul.addr %s327, 8
        %s329 = scalar_lea.vmem %s2, %s328
      $region43: #{tpu_custom_call.1} parent=38 // pred_fallthru
        _
    $region39: #{tpu_custom_call.1} parent=5 // pred_fallthru
      _
  $region6: #{tpu_custom_call.1} parent=0 // loop_footer
    %s20 = sadd.s32 1, %s16
  $region7: #{tpu_custom_call.1} parent=0 // loop_footer_branch
    %15 = sbr.rel target = $region3
  $region8: #{tpu_custom_call.1} parent=0 // loop_exit
    _

</llo_original>
